<compile_context>
chip_gen: v5e
topology: v5e:2x2
jax: 0.10.0
libtpu: 0.0.40
codegen_flags: <defaults>
</compile_context>

<pallas_src>
import jax
import jax.numpy as jnp
from jax.experimental import pallas as pl
from jax.experimental.pallas import tpu as pltpu

LANE = 1024          # lane-dense last dim (multiple of 128)
TM = 512             # rows per tile  -> 512 * 1024 * 4 B = 2 MiB per block
_FAST_MAX_ROWS = TM  # whole slab fits one tile -> single-block path


def _lintrans_kernel(w_ref, b_ref, x_ref, o_ref):
    # w_ref / b_ref: (1, 1) scalars in SMEM; x_ref / o_ref: (TM, LANE) VMEM tiles
    w = w_ref[0, 0]
    b = b_ref[0, 0]
    o_ref[...] = x_ref[...] * w + b


def _pad_flat(x_flat, padded_len):
    total = x_flat.shape[0]
    if padded_len == total:
        return x_flat
    return jnp.concatenate(
        [x_flat, jnp.zeros((padded_len - total,), dtype=x_flat.dtype)]
    )


def lintrans_forward(x, w, b):
    """y = x * w + b for 5-D x, matching LinTransModel.forward (batch_size=1).

    x: float32 array with ndim == 5 (N, C, D, H, W)
    w, b: float32 arrays of shape (1, 1) (nn.Parameter shapes from __init__)
    """
    assert x.ndim == 5, "LinTransModel.forward requires a 5-D input"
    assert w.shape == (1, 1) and b.shape == (1, 1), (
        "flatten-based kernel supports batch_size=1 only"
    )
    # TODO(synk): batch_size > 1 (w/b shape (B,1) broadcasting against x's H dim)
    # would need a per-row index_map instead of a flat reshape.

    orig_shape = x.shape
    total = x.size
    x_flat = jnp.ravel(x)

    rows_needed = pl.cdiv(total, LANE)

    compiler_params = pltpu.CompilerParams(
        dimension_semantics=("parallel",),
        vmem_limit_bytes=32 * 1024 * 1024,
    )

    if rows_needed <= _FAST_MAX_ROWS:
        # ---- small-input fast path: one block covering the whole slab ----
        rows = int(rows_needed)
        padded = rows * LANE
        x2d = _pad_flat(x_flat, padded).reshape(rows, LANE)
        y2d = pl.pallas_call(
            _lintrans_kernel,
            out_shape=jax.ShapeDtypeStruct((rows, LANE), x.dtype),
            grid_spec=pltpu.PrefetchScalarGridSpec(
                num_scalar_prefetch=0,
                grid=(1,),
                in_specs=[
                    pl.BlockSpec(memory_space=pltpu.SMEM),   # w (1,1)
                    pl.BlockSpec(memory_space=pltpu.SMEM),   # b (1,1)
                    pl.BlockSpec((rows, LANE), lambda i: (0, 0)),
                ],
                out_specs=pl.BlockSpec((rows, LANE), lambda i: (0, 0)),
            ),
            compiler_params=compiler_params,
        )(w, b, x2d)
    else:
        # ---- big path: 2 MiB lane-dense tiles, padding bounded to <32 KiB ----
        pad_unit = 8 * LANE
        padded = ((total + pad_unit - 1) // pad_unit) * pad_unit
        rows = padded // LANE                 # multiple of 8
        x2d = _pad_flat(x_flat, padded).reshape(rows, LANE)
        grid = (pl.cdiv(rows, TM),)           # ragged final tile handled by Pallas
        y2d = pl.pallas_call(
            _lintrans_kernel,
            out_shape=jax.ShapeDtypeStruct((rows, LANE), x.dtype),
            grid_spec=pltpu.PrefetchScalarGridSpec(
                num_scalar_prefetch=0,
                grid=grid,
                in_specs=[
                    pl.BlockSpec(memory_space=pltpu.SMEM),   # w (1,1)
                    pl.BlockSpec(memory_space=pltpu.SMEM),   # b (1,1)
                    pl.BlockSpec((TM, LANE), lambda i: (i, 0)),
                ],
                out_specs=pl.BlockSpec((TM, LANE), lambda i: (i, 0)),
            ),
            compiler_params=compiler_params,
        )(w, b, x2d)

    if padded == total:
        return y2d.reshape(orig_shape)
    return y2d.reshape(-1)[:total].reshape(orig_shape)


if __name__ == "__main__":
    key = jax.random.PRNGKey(0)

    # Deterministic parameters (nn.Parameter shapes from LinTransModel.__init__,
    # nudged away from the identity so the kernel does real work).
    w = jnp.array([[1.5]], dtype=jnp.float32)
    b = jnp.array([[-0.25]], dtype=jnp.float32)

    # 1) Small 5-D input (N, C, D, H, W) — exercises the single-block fast path
    #    (lane-aligned, no pad/slice on the hot path).
    k1, k2, k3 = jax.random.split(key, 3)
    x_small = jax.random.normal(k1, (2, 4, 3, 16, 16), dtype=jnp.float32)
    y_small = jax.block_until_ready(lintrans_forward(x_small, w, b))
    assert y_small.shape == x_small.shape
    assert jnp.allclose(y_small, x_small * w[0, 0] + b[0, 0], atol=1e-6)

    # 2) Non-lane-aligned small input — exercises the pad/slice correctness path.
    x_ragged = jax.random.normal(k2, (1, 3, 5, 67, 33), dtype=jnp.float32)
    y_ragged = jax.block_until_ready(lintrans_forward(x_ragged, w, b))
    assert y_ragged.shape == x_ragged.shape
    assert jnp.allclose(y_ragged, x_ragged * w[0, 0] + b[0, 0], atol=1e-6)

    # 3) Larger input — exercises the tiled (multi-grid-step) big path.
    x_big = jax.random.normal(k3, (1, 8, 8, 128, 128), dtype=jnp.float32)
    y_big = jax.block_until_ready(lintrans_forward(x_big, w, b))
    assert y_big.shape == x_big.shape
    assert jnp.allclose(y_big, x_big * w[0, 0] + b[0, 0], atol=1e-6)

    print("KERNEL_OK")
</pallas_src>

<mosaic_0001>
module attributes {stable_mosaic.version = 11 : i64} {
  func.func @_lintrans_kernel(%arg0: i32, %arg1: memref<1x1xf32, #tpu.memory_space<smem>>, %arg2: memref<1x1xf32, #tpu.memory_space<smem>>, %arg3: memref<6x1024xf32, #tpu.memory_space<vmem>>, %arg4: memref<6x1024xf32, #tpu.memory_space<vmem>>) attributes {dimension_semantics = [#tpu.dimension_semantics<parallel>], iteration_bounds = array<i64: 1>, scalar_prefetch = 0 : i64, scratch_operands = 0 : i64, tpu.core_type = #tpu.core_type<tc>, window_params = [{transform_indices = @transform_0, window_bounds = array<i64: 1, 1>}, {transform_indices = @transform_1, window_bounds = array<i64: 1, 1>}, {pipeline_mode = #tpu.pipeline_mode<synchronous>, transform_indices = @transform_2, window_bounds = array<i64: 6, 1024>}, {pipeline_mode = #tpu.pipeline_mode<synchronous>, transform_indices = @transform_3, window_bounds = array<i64: 6, 1024>}]} {
    %c0 = arith.constant 0 : index
    %c0_0 = arith.constant 0 : index
    %0 = memref.load %arg1[%c0, %c0_0] : memref<1x1xf32, #tpu.memory_space<smem>>
    %c0_1 = arith.constant 0 : index
    %c0_2 = arith.constant 0 : index
    %1 = memref.load %arg2[%c0_1, %c0_2] : memref<1x1xf32, #tpu.memory_space<smem>>
    %c0_3 = arith.constant 0 : index
    %c0_4 = arith.constant 0 : index
    %2 = vector.load %arg3[%c0_3, %c0_4] : memref<6x1024xf32, #tpu.memory_space<vmem>>, vector<6x1024xf32>
    %3 = vector.broadcast %0 : f32 to vector<6x1024xf32>
    %4 = arith.mulf %2, %3 : vector<6x1024xf32>
    %5 = vector.broadcast %1 : f32 to vector<6x1024xf32>
    %6 = arith.addf %4, %5 : vector<6x1024xf32>
    %c0_5 = arith.constant 0 : index
    %c0_6 = arith.constant 0 : index
    %7 = vector.load %arg4[%c0_5, %c0_6] : memref<6x1024xf32, #tpu.memory_space<vmem>>, vector<6x1024xf32>
    tpu.vector_store %arg4[%c0_5, %c0_6], %6 {strides = array<i32>} : memref<6x1024xf32, #tpu.memory_space<vmem>>, vector<6x1024xf32>,
    return
  }
  func.func @transform_0(%arg0: i32) -> (i32, i32) {
    %c0_i32 = arith.constant 0 : i32
    %c0_i32_0 = arith.constant 0 : i32
    %c0_i32_1 = arith.constant 0 : i32
    return %c0_i32, %c0_i32_0 : i32, i32
  }
  func.func @transform_1(%arg0: i32) -> (i32, i32) {
    %c0_i32 = arith.constant 0 : i32
    %c0_i32_0 = arith.constant 0 : i32
    %c0_i32_1 = arith.constant 0 : i32
    return %c0_i32, %c0_i32_0 : i32, i32
  }
  func.func @transform_2(%arg0: i32) -> (i32, i32) {
    %c0_i32 = arith.constant 0 : i32
    %c0_i32_0 = arith.constant 0 : i32
    %c0_i32_1 = arith.constant 0 : i32
    return %c0_i32, %c0_i32_0 : i32, i32
  }
  func.func @transform_3(%arg0: i32) -> (i32, i32) {
    %c0_i32 = arith.constant 0 : i32
    %c0_i32_0 = arith.constant 0 : i32
    %c0_i32_1 = arith.constant 0 : i32
    return %c0_i32, %c0_i32_0 : i32, i32
  }
}

</mosaic_0001>

<llo_original>
// kernel: tpu_custom_call.1
$region0: #{tpu_custom_call.1}
  #allocation0 [shape = 'u32[]', space=smem, size = 0x4, offset = 0x4, fixed_abs, tag = 'smem constant byte address 0x4 - core index']
  #allocation1 [shape = 'u32[72,128]{1,0:T(1,128)}', space=vmem, size = 0x9000, scoped, tag = 'internal scratch']
  #allocation2 [shape = 'f32[1,1]{1,0:T(1,128)S(6)}', space=smem, size = 0x200, scoped, tag = 'scoped memory for tpu_custom_call.1']
  #allocation3 [shape = 'f32[1,1]{1,0:T(1,128)S(6)}', space=smem, size = 0x200, scoped, tag = 'scoped memory for tpu_custom_call.1']
  %s0 = inlined_call_operand.<no memory space> [shape: f32[1,1], index: 0, kind: input, shape index: {}]
  %s1 = inlined_call_operand.<no memory space> [shape: f32[1,1], index: 1, kind: input, shape index: {}]
  %s2 = inlined_call_operand.hbm [shape: f32[6,1024], index: 2, kind: input, shape index: {}]
  %s3 = inlined_call_operand.hbm [shape: f32[6,1024], index: 3, kind: output, shape index: {}]
  %s4 = sld [smem:[#allocation0]]
  $region26: #{tpu_custom_call.1} parent=0
    _
  %s6 = ssub.s32 1, %s4
  %s7 = scalar_select 0, %s6, %s4
  %8 = sst [smem:[#allocation2]] %s0
  %9 = sst [smem:[#allocation3]] %s1
  $region1: #{tpu_custom_call.1} parent=0
    #allocation4 [shape = 'u8[32768]{0}', space=vmem, size = 0x8000, scoped, tag = 'input window, operand 2, single buffered']
    #allocation5 [shape = 's32[1]{0}', space=sflag, size = 0x4, scoped, tag = 'scoped memory for tpu_custom_call.1']
    #allocation6 [shape = 's32[1]{0}', space=sflag, size = 0x4, scoped, tag = 'scoped memory for tpu_custom_call.1']
    #allocation7 [shape = 'u8[32768]{0}', space=vmem, size = 0x8000, scoped, tag = 'output window, operand 0, single buffered']
    %10 = vsyncpa [#allocation5], 0
    %11 = vsyncpa [#allocation6], 0
    // Predicated region
    $region2: #{tpu_custom_call.1} parent=1 // pred_check
      _
    $region3: #{tpu_custom_call.1} parent=1 // pred_check_branch
      %13 = sbr.rel (0) target = $region5
    $region4: #{tpu_custom_call.1} parent=1 // pred_region
      _
    $region5: #{tpu_custom_call.1} parent=1 // pred_fallthru
      _
    // Predicated region
    $region6: #{tpu_custom_call.1} parent=1 // pred_check
      _
    $region7: #{tpu_custom_call.1} parent=1 // pred_check_branch
      %15 = sbr.rel (0) target = $region9
    $region8: #{tpu_custom_call.1} parent=1 // pred_region
      _
    $region9: #{tpu_custom_call.1} parent=1 // pred_fallthru
      _
    // Predicated region
    $region10: #{tpu_custom_call.1} parent=1 // pred_check
      _
    $region11: #{tpu_custom_call.1} parent=1 // pred_check_branch
      %17 = sbr.rel (0) target = $region13
    $region12: #{tpu_custom_call.1} parent=1 // pred_region
      %19 = vsyncadd [#allocation5], 0
      %s21 = sshll.u32 %s2, 4
      %s22 = int_to_ptr.hbm [resolvable:$true] %s21
      %s23 = sshll.u32 [#allocation4], 4
      %s24 = int_to_ptr.vmem [resolvable:$true] %s23
      %26 = dma.hbm_to_vmem [thread:$0]  %s22, 1024, %s24, [#allocation5]
    $region13: #{tpu_custom_call.1} parent=1 // pred_fallthru
      _
    // Predicated region
    $region14: #{tpu_custom_call.1} parent=1 // pred_check
      _
    $region15: #{tpu_custom_call.1} parent=1 // pred_check_branch
      %28 = sbr.rel (0) target = $region17
    $region16: #{tpu_custom_call.1} parent=1 // pred_region
      %30 = dma.done [#allocation5], 1024
    $region17: #{tpu_custom_call.1} parent=1 // pred_fallthru
      _
    %s31 = sld [smem:[#allocation2]]
    %s32 = sld [smem:[#allocation3]]
    %v33 = vld [vmem:[#allocation4] sm:$0x3f]
    %v34 = vld [vmem:[#allocation4 + $0x8] sm:$0x3f]
    %v35 = vld [vmem:[#allocation4 + $0x10] sm:$0x3f]
    %v36 = vld [vmem:[#allocation4 + $0x18] sm:$0x3f]
    %v37 = vld [vmem:[#allocation4 + $0x20] sm:$0x3f]
    %v38 = vld [vmem:[#allocation4 + $0x28] sm:$0x3f]
    %v39 = vld [vmem:[#allocation4 + $0x30] sm:$0x3f]
    %v40 = vld [vmem:[#allocation4 + $0x38] sm:$0x3f]
    %v41 = vstv %s31
    %v42 = vmul.f32 %v33, %v41
    %v43 = vmul.f32 %v34, %v41
    %v44 = vmul.f32 %v35, %v41
    %v45 = vmul.f32 %v36, %v41
    %v46 = vmul.f32 %v37, %v41
    %v47 = vmul.f32 %v38, %v41
    %v48 = vmul.f32 %v39, %v41
    %v49 = vmul.f32 %v40, %v41
    %v50 = vstv %s32
    %v51 = vadd.f32 %v42, %v50
    %v52 = vadd.f32 %v43, %v50
    %v53 = vadd.f32 %v44, %v50
    %v54 = vadd.f32 %v45, %v50
    %v55 = vadd.f32 %v46, %v50
    %v56 = vadd.f32 %v47, %v50
    %v57 = vadd.f32 %v48, %v50
    %v58 = vadd.f32 %v49, %v50
    %59 = vst [vmem:[#allocation7] sm:$0x3f] %v51
    %60 = vst [vmem:[#allocation7 + $0x8] sm:$0x3f] %v52
    %61 = vst [vmem:[#allocation7 + $0x10] sm:$0x3f] %v53
    %62 = vst [vmem:[#allocation7 + $0x18] sm:$0x3f] %v54
    %63 = vst [vmem:[#allocation7 + $0x20] sm:$0x3f] %v55
    %64 = vst [vmem:[#allocation7 + $0x28] sm:$0x3f] %v56
    %65 = vst [vmem:[#allocation7 + $0x30] sm:$0x3f] %v57
    %66 = vst [vmem:[#allocation7 + $0x38] sm:$0x3f] %v58
    // Predicated region
    $region18: #{tpu_custom_call.1} parent=1 // pred_check
      _
    $region19: #{tpu_custom_call.1} parent=1 // pred_check_branch
      %68 = sbr.rel (0) target = $region21
    $region20: #{tpu_custom_call.1} parent=1 // pred_region
      %70 = vsyncadd [#allocation6], 0
      %s72 = sshll.u32 [#allocation7], 4
      %s73 = int_to_ptr.vmem [resolvable:$true] %s72
      %s74 = sshll.u32 %s3, 4
      %s75 = int_to_ptr.hbm [resolvable:$true] %s74
      %77 = dma.vmem_to_hbm [thread:$0]  %s73, 1024, %s75, [#allocation6]
    $region21: #{tpu_custom_call.1} parent=1 // pred_fallthru
      _
    // Predicated region
    $region22: #{tpu_custom_call.1} parent=1 // pred_check
      _
    $region23: #{tpu_custom_call.1} parent=1 // pred_check_branch
      %79 = sbr.rel (0) target = $region25
    $region24: #{tpu_custom_call.1} parent=1 // pred_region
      %81 = dma.done [#allocation6], 1024
    $region25: #{tpu_custom_call.1} parent=1 // pred_fallthru
      _
    %82 = vsyncpa [#allocation5], 1
    %83 = vsyncpa [#allocation6], 1

</llo_original>
